<compile_context>
chip_gen: v7x
topology: tpu7x:2x2x1
jax: 0.10.0
libtpu: 0.0.40
codegen_flags: <defaults>
</compile_context>

<pallas_src>
import math

import jax
import jax.numpy as jnp
from jax.experimental import pallas as pl
from jax.experimental.pallas import tpu as pltpu

_LANES = 512                 # lane-dense last dim (multiple of 128)
_SUBLANES = 8                # sublane granularity
_MAX_BLOCK_ROWS = 1024       # 1024 x 512 x 4 B = 2 MiB per block
_PALLAS_THRESHOLD_BYTES = 256 * 1024   # below this, launch latency dominates


def _copy_kernel(x_ref, o_ref):
    # The entire "compute" of this module is an element copy.
    o_ref[...] = x_ref[...]


def _pallas_identity_copy(x2d):
    """Tiled, lane-dense identity copy of a (rows, _LANES) f32/any slab."""
    rows, lanes = x2d.shape
    block_rows = min(rows, _MAX_BLOCK_ROWS)
    grid = (pl.cdiv(rows, block_rows),)
    return pl.pallas_call(
        _copy_kernel,
        out_shape=jax.ShapeDtypeStruct((rows, lanes), x2d.dtype),
        grid=grid,
        in_specs=[pl.BlockSpec((block_rows, lanes), lambda i: (i, 0))],
        out_specs=pl.BlockSpec((block_rows, lanes), lambda i: (i, 0)),
        # Output aliases input: the copy degenerates to (at most) an in-place
        # writeback, halving HBM traffic for this mem-bound op.
        input_output_aliases={0: 0},
        compiler_params=pltpu.CompilerParams(
            dimension_semantics=("parallel",)),
    )(x2d)


def simple_camera_encoder(x, *, force_pallas=False):
    """Pallas equivalent of SimpleCameraEncoder.forward.

    x: array of shape (B, ...) — e.g. a GQN camera pose (B, 7) or (B, C, H, W).
    returns: array of shape (B, D, 1, 1) with D = prod of non-batch dims.
    """
    # TODO(synk): the reference forward returns an undefined name `output`;
    # we return the reshaped input, the only sensible semantics.
    b = x.shape[0]
    d = math.prod(x.shape[1:]) if len(x.shape) > 1 else 1
    n = b * d
    nbytes = n * jnp.dtype(x.dtype).itemsize

    # Fast path: the module is a pure reshape — a zero-cost metadata op.
    if not force_pallas and nbytes < _PALLAS_THRESHOLD_BYTES:
        return x.reshape(b, d, 1, 1)

    # Pallas path: lane-dense tiled copy.
    tile = _SUBLANES * _LANES
    padded_n = ((n + tile - 1) // tile) * tile
    flat = x.reshape(n)
    if padded_n != n:
        flat = jnp.pad(flat, (0, padded_n - n))
    x2d = flat.reshape(padded_n // _LANES, _LANES)

    out2d = _pallas_identity_copy(x2d)
    return out2d.reshape(padded_n)[:n].reshape(b, d, 1, 1)


if __name__ == "__main__":
    key = jax.random.PRNGKey(0)
    k1, k2, k3 = jax.random.split(key, 3)

    # 1) Image-like input, forced through the Pallas kernel path.
    x_img = jax.random.normal(k1, (2, 4, 16, 16), dtype=jnp.float32)
    out_img = jax.block_until_ready(simple_camera_encoder(x_img, force_pallas=True))
    ref_img = x_img.reshape(2, -1, 1, 1)
    assert out_img.shape == (2, 4 * 16 * 16, 1, 1), out_img.shape
    assert jnp.allclose(out_img, ref_img), "mismatch vs reference reshape (img)"

    # 2) Real GQN camera pose: tiny payload -> pure-reshape fast path.
    x_pose = jax.random.normal(k2, (2, 7), dtype=jnp.float32)
    out_pose = jax.block_until_ready(simple_camera_encoder(x_pose))
    ref_pose = x_pose.reshape(2, -1, 1, 1)
    assert out_pose.shape == (2, 7, 1, 1), out_pose.shape
    assert jnp.allclose(out_pose, ref_pose), "mismatch vs reference reshape (pose)"

    # 3) Medium input large enough to take the Pallas path naturally and
    #    exercise a multi-block grid (rows=2048 -> grid=(2,)).
    x_big = jax.random.normal(k3, (64, 64, 16, 16), dtype=jnp.float32)
    out_big = jax.block_until_ready(simple_camera_encoder(x_big))
    ref_big = x_big.reshape(64, -1, 1, 1)
    assert out_big.shape == (64, 64 * 16 * 16, 1, 1), out_big.shape
    assert jnp.allclose(out_big, ref_big), "mismatch vs reference reshape (big)"

    print("KERNEL_OK")
</pallas_src>

<mosaic_0001>
module attributes {stable_mosaic.version = 11 : i64} {
  func.func @_copy_kernel(%arg0: i32, %arg1: memref<8x512xf32, #tpu.memory_space<vmem>>, %arg2: memref<8x512xf32, #tpu.memory_space<vmem>>) attributes {dimension_semantics = [#tpu.dimension_semantics<parallel>], iteration_bounds = array<i64: 1>, scalar_prefetch = 0 : i64, scratch_operands = 0 : i64, tpu.core_type = #tpu.core_type<tc>, window_params = [{transform_indices = @transform_0, window_bounds = array<i64: 8, 512>}, {transform_indices = @transform_1, window_bounds = array<i64: 8, 512>}]} {
    %c0 = arith.constant 0 : index
    %c0_0 = arith.constant 0 : index
    %0 = vector.load %arg1[%c0, %c0_0] : memref<8x512xf32, #tpu.memory_space<vmem>>, vector<8x512xf32>
    %c0_1 = arith.constant 0 : index
    %c0_2 = arith.constant 0 : index
    %1 = vector.load %arg2[%c0_1, %c0_2] : memref<8x512xf32, #tpu.memory_space<vmem>>, vector<8x512xf32>
    tpu.vector_store %arg2[%c0_1, %c0_2], %0 {strides = array<i32>} : memref<8x512xf32, #tpu.memory_space<vmem>>, vector<8x512xf32>,
    return
  }
  func.func @transform_0(%arg0: i32) -> (i32, i32) {
    %c0_i32 = arith.constant 0 : i32
    %c0_i32_0 = arith.constant 0 : i32
    return %arg0, %c0_i32 : i32, i32
  }
  func.func @transform_1(%arg0: i32) -> (i32, i32) {
    %c0_i32 = arith.constant 0 : i32
    %c0_i32_0 = arith.constant 0 : i32
    return %arg0, %c0_i32 : i32, i32
  }
}

</mosaic_0001>

<llo_original>
// kernel: tpu_custom_call.1
$region0: #{tpu_custom_call.1}
  #allocation0 [shape = 'u32[]', space=smem, size = 0x4, offset = 0x4, fixed_abs, tag = 'smem constant byte address 0x4 - core index']
  #allocation1 [shape = 'u32[144,128]{1,0:T(1,128)}', space=vmem, size = 0x12000, scoped, tag = 'internal scratch']
  %s0 = inlined_call_operand.hbm [shape: f32[8,512], index: 0, kind: input, shape index: {}, may-alias: {0,1}]
  %s1 = inlined_call_operand.hbm [shape: f32[8,512], index: 1, kind: output, shape index: {}, may-alias: {0,1}]
  %s2 = sld [smem:[#allocation0]]
  $region18: #{tpu_custom_call.1} parent=0
    _
  %s4 = ssub.s32 1, %s2
  %s5 = scalar_select 0, %s4, %s2
  $region1: #{tpu_custom_call.1} parent=0
    #allocation2 [shape = 'u8[16384]{0}', space=vmem, size = 0x4000, scoped, tag = 'input window, operand 0, single buffered']
    #allocation3 [shape = 's32[1]{0}', space=sflag, size = 0x4, scoped, tag = 'scoped memory for tpu_custom_call.1']
    #allocation4 [shape = 's32[1]{0}', space=sflag, size = 0x4, scoped, tag = 'scoped memory for tpu_custom_call.1']
    #allocation5 [shape = 'u8[16384]{0}', space=vmem, size = 0x4000, scoped, tag = 'output window, operand 0, single buffered']
    %6 = vsyncpa [#allocation3], 0
    %7 = vsyncpa [#allocation4], 0
    // Predicated region
    $region2: #{tpu_custom_call.1} parent=1 // pred_check
      _
    $region3: #{tpu_custom_call.1} parent=1 // pred_check_branch
      %9 = sbr.rel (0) target = $region5
    $region4: #{tpu_custom_call.1} parent=1 // pred_region
      %s11 = ssub.s32 512, 512
      %12 = vsyncadd [#allocation3], %s11
      %s14 = sshll.u32 [#allocation2], 4
      %s15 = int_to_ptr.vmem [resolvable:$true] %s14
      %17 = dma.hbm_to_vmem [thread:$0]  %s0, 512, %s15, [#allocation3]
    $region5: #{tpu_custom_call.1} parent=1 // pred_fallthru
      _
    // Predicated region
    $region6: #{tpu_custom_call.1} parent=1 // pred_check
      _
    $region7: #{tpu_custom_call.1} parent=1 // pred_check_branch
      %19 = sbr.rel (0) target = $region9
    $region8: #{tpu_custom_call.1} parent=1 // pred_region
      %20 = dma.done [#allocation3], 512
    $region9: #{tpu_custom_call.1} parent=1 // pred_fallthru
      _
    %v21 = vld [vmem:[#allocation2] sm:$0xff]
    %v22 = vld [vmem:[#allocation2 + $0x8] sm:$0xff]
    %v23 = vld [vmem:[#allocation2 + $0x10] sm:$0xff]
    %v24 = vld [vmem:[#allocation2 + $0x18] sm:$0xff]
    %25 = vst [vmem:[#allocation5] sm:$0xff] %v21
    %26 = vst [vmem:[#allocation5 + $0x8] sm:$0xff] %v22
    %27 = vst [vmem:[#allocation5 + $0x10] sm:$0xff] %v23
    %28 = vst [vmem:[#allocation5 + $0x18] sm:$0xff] %v24
    // Predicated region
    $region10: #{tpu_custom_call.1} parent=1 // pred_check
      _
    $region11: #{tpu_custom_call.1} parent=1 // pred_check_branch
      %30 = sbr.rel (0) target = $region13
    $region12: #{tpu_custom_call.1} parent=1 // pred_region
      %s32 = ssub.s32 512, 512
      %33 = vsyncadd [#allocation4], %s32
      %s35 = sshll.u32 [#allocation5], 4
      %s36 = int_to_ptr.vmem [resolvable:$true] %s35
      %38 = dma.vmem_to_hbm [thread:$0]  %s36, 512, %s1, [#allocation4]
    $region13: #{tpu_custom_call.1} parent=1 // pred_fallthru
      _
    // Predicated region
    $region14: #{tpu_custom_call.1} parent=1 // pred_check
      _
    $region15: #{tpu_custom_call.1} parent=1 // pred_check_branch
      %40 = sbr.rel (0) target = $region17
    $region16: #{tpu_custom_call.1} parent=1 // pred_region
      %41 = dma.done [#allocation4], 512
    $region17: #{tpu_custom_call.1} parent=1 // pred_fallthru
      _
    %42 = vsyncpa [#allocation3], 1
    %43 = vsyncpa [#allocation4], 1

</llo_original>
